<compile_context>
chip_gen: v7x
topology: tpu7x:2x2x1
jax: 0.10.0
libtpu: 0.0.40
codegen_flags: <defaults>
</compile_context>

<pallas_src>
import functools

import jax
import jax.numpy as jnp
import numpy as np
from jax.experimental import pallas as pl
from jax.experimental.pallas import tpu as pltpu

_NSTATS = 4  # [intersection I, predicted-prob mass P, true-pixel count T, summed NLL]


def _round_up(v, m):
    return ((v + m - 1) // m) * m


def _make_stats_kernel(n_classes, tile_pixels, n_tiles, tiles_per_split,
                       total_pixels, approx_recip):
    C = n_classes
    TPL = tile_pixels
    HW = total_pixels
    TPS = tiles_per_split
    has_partial_tail = (n_tiles * TPL != HW)   # static

    def kernel(x_ref, t_ref, o_ref):
        t_idx = pl.program_id(2)
        s_idx = pl.program_id(1)
        g_idx = s_idx * TPS + t_idx            # global pixel-tile index

        @pl.when(t_idx == 0)
        def _():
            o_ref[...] = jnp.zeros_like(o_ref)

        def accumulate(masked):
            x = x_ref[0].astype(jnp.float32)   # (C, TPL) logits: classes on sublanes
            tgt = t_ref[0]                     # (1, TPL) class index per pixel
            cls = jax.lax.broadcasted_iota(jnp.int32, (C, TPL), 0)
            hit = cls == tgt                   # (C, TPL) one-hot predicate
            if masked:
                lane = jax.lax.broadcasted_iota(jnp.int32, (1, TPL), 1) + g_idx * TPL
                valid = lane < HW              # (1, TPL)
                x = jnp.where(valid, x, 0.0)   # NaN/Inf-safe padded tail
                hit = hit & valid

            # softmax / log-sum-exp over the class (sublane) axis
            m = jnp.max(x, axis=0, keepdims=True)        # (1, TPL)
            ex = jnp.exp(x - m)                          # (C, TPL)  EUP
            ssum = jnp.sum(ex, axis=0, keepdims=True)    # (1, TPL)
            if approx_recip:
                inv = pl.reciprocal(ssum, approx=True)   # EUP vrcp
            else:
                inv = 1.0 / ssum                         # TPL divides, not C*TPL
            p = ex * inv                                 # (C, TPL) softmax probs
            lse = m + jnp.log(ssum)                      # (1, TPL)

            pmass = jnp.where(valid, p, 0.0) if masked else p

            # Per-tile lane reduction straight to (C, 1): no big accumulator RMW.
            i_t = jnp.sum(jnp.where(hit, p, 0.0), axis=-1, keepdims=True)
            p_t = jnp.sum(pmass, axis=-1, keepdims=True)
            c_t = jnp.sum(jnp.where(hit, 1.0, 0.0), axis=-1, keepdims=True)
            n_t = jnp.sum(jnp.where(hit, lse - x, 0.0), axis=-1, keepdims=True)

            col = jax.lax.broadcasted_iota(jnp.int32, (C, _NSTATS), 1)
            stats = jnp.where(col == 0, i_t,
                              jnp.where(col == 1, p_t,
                                        jnp.where(col == 2, c_t, n_t)))  # (C, 4)
            o_ref[0, 0] += stats

        if has_partial_tail:
            # Only the final partial tile pays for the validity mask.
            @pl.when(g_idx == n_tiles - 1)
            def _():
                accumulate(masked=True)

            @pl.when(g_idx != n_tiles - 1)
            def _():
                accumulate(masked=False)
        else:
            accumulate(masked=False)

    return kernel


@functools.partial(
    jax.jit,
    static_argnames=("W_CE", "W_IoU", "W_Dice", "avg", "tile_pixels",
                     "approx_recip", "core_split"))
def custom_loss(logits_nchw, target_nhw, ce_weights,
                W_CE=1.0, W_IoU=1.0, W_Dice=1.0, avg=True,
                tile_pixels=32768, approx_recip=False, core_split=True):
    """Pallas implementation of CustomLoss.forward. Returns scalar f32."""
    N, C, H, W = logits_nchw.shape
    HW = H * W

    # Free reshapes of contiguous NCHW / NHW — no transpose, no pad, no dtype cast
    # (bf16 logits are streamed as bf16 and upcast to f32 inside the kernel).
    x = logits_nchw.reshape(N, C, HW)
    t = target_nhw.reshape(N, 1, HW).astype(jnp.int32)

    # --- pixel-tile sizing ---------------------------------------------------
    # Cap the tile so double-buffered inputs + in-flight f32 temporaries stay
    # well inside the default scoped-VMEM limits (16 MiB v5e, 32 MiB v6e/v7x).
    itemsize = x.dtype.itemsize
    bytes_per_pixel = 2 * (C * itemsize + 4) + 10 * C * 4
    budget = 10 * 1024 * 1024
    cap = max(128, (budget // bytes_per_pixel) // 128 * 128)
    req = max(128, (int(tile_pixels) // 128) * 128)
    TPL = min(req, cap, _round_up(HW, 128))     # always a multiple of 128
    n_tiles = pl.cdiv(HW, TPL)

    # --- optional pixel-range split so both v7x TensorCores get work ---------
    n_split = 2 if (core_split and n_tiles >= 2 and n_tiles % 2 == 0) else 1
    tps = n_tiles // n_split

    kernel = _make_stats_kernel(C, TPL, n_tiles, tps, HW, approx_recip)

    stats = pl.pallas_call(
        kernel,
        out_shape=jax.ShapeDtypeStruct((N, n_split, C, _NSTATS), jnp.float32),
        grid_spec=pltpu.PrefetchScalarGridSpec(
            num_scalar_prefetch=0,
            grid=(N, n_split, tps),
            in_specs=[
                pl.BlockSpec((1, C, TPL), lambda n, s, t: (n, 0, s * tps + t)),
                pl.BlockSpec((1, 1, TPL), lambda n, s, t: (n, 0, s * tps + t)),
            ],
            out_specs=pl.BlockSpec((1, 1, C, _NSTATS),
                                   lambda n, s, t: (n, s, 0, 0)),
        ),
        compiler_params=pltpu.CompilerParams(
            dimension_semantics=("parallel", "parallel", "arbitrary")),
    )(x, t)

    # --- tiny O(C) finalize (dice / jaccard / weighted CE), fused by XLA -----
    S = jnp.sum(stats, axis=(0, 1))            # (C, 4)
    I, P, T, NLL = S[:, 0], S[:, 1], S[:, 2], S[:, 3]

    wv = jnp.asarray(ce_weights, jnp.float32).reshape(C)
    eps = 1e-7
    card = P + T
    dice = (2.0 * I) / jnp.maximum(card, eps)
    jacc = I / jnp.maximum(card - I, eps)
    has_true = (T > 0).astype(jnp.float32)
    dice_loss = jnp.sum((1.0 - dice) * has_true) / C
    iou_loss = jnp.sum((1.0 - jacc) * has_true) / C
    ce = jnp.sum(wv * NLL) / jnp.sum(wv * T)   # weighted-mean CrossEntropyLoss

    total = W_CE * ce + W_IoU * iou_loss + W_Dice * dice_loss
    if avg:
        total = total / 3.0
    return total


def _reference_loss(logits_nchw, target_nhw, ce_weights,
                    W_CE=1.0, W_IoU=1.0, W_Dice=1.0, avg=True):
    """Pure-JAX mirror of the PyTorch CustomLoss forward (for verification)."""
    N, C, H, W = logits_nchw.shape
    x = jnp.transpose(logits_nchw, (0, 2, 3, 1)).reshape(-1, C).astype(jnp.float32)
    t = target_nhw.reshape(-1).astype(jnp.int32)
    logp = jax.nn.log_softmax(x, axis=-1)
    p = jnp.exp(logp)
    onehot = jax.nn.one_hot(t, C, dtype=jnp.float32)
    wv = jnp.asarray(ce_weights, jnp.float32)

    w_pix = wv[t]
    nll = -jnp.take_along_axis(logp, t[:, None], axis=-1)[:, 0]
    ce = jnp.sum(w_pix * nll) / jnp.sum(w_pix)

    I = jnp.sum(p * onehot, axis=0)
    P = jnp.sum(p, axis=0)
    T = jnp.sum(onehot, axis=0)
    eps = 1e-7
    dice = (2.0 * I) / jnp.maximum(P + T, eps)
    jacc = I / jnp.maximum(P + T - I, eps)
    mask = (T > 0).astype(jnp.float32)
    dice_loss = jnp.mean((1.0 - dice) * mask)
    iou_loss = jnp.mean((1.0 - jacc) * mask)

    total = W_CE * ce + W_IoU * iou_loss + W_Dice * dice_loss
    if avg:
        total = total / 3.0
    return total


if __name__ == "__main__":
    key = jax.random.PRNGKey(0)
    keys = jax.random.split(key, 6)

    # Case 1: canonical small shapes (batch=2, classes=4, 16x16). H*W=256, one tile.
    N, C, H, W = 2, 4, 16, 16
    logits = jax.random.normal(keys[0], (N, C, H, W), dtype=jnp.float32)
    target = jax.random.randint(keys[1], (N, H, W), 0, C, dtype=jnp.int32)
    ce_weights = 0.5 + jnp.arange(C, dtype=jnp.float32) / C

    loss = jax.block_until_ready(custom_loss(logits, target, ce_weights))
    ref = _reference_loss(logits, target, ce_weights)
    np.testing.assert_allclose(np.asarray(loss), np.asarray(ref), rtol=1e-5, atol=1e-6)

    # Case 2: multi-tile + pixel-split path (2 tiles of 128 -> one tile per split).
    loss2 = jax.block_until_ready(
        custom_loss(logits, target, ce_weights, tile_pixels=128))
    np.testing.assert_allclose(np.asarray(loss2), np.asarray(ref), rtol=1e-5, atol=1e-6)

    # Case 3: ragged pixel count (H*W=240) -> only the last tile runs the masked body.
    N2, C2, H2, W2 = 1, 5, 12, 20
    logits2 = jax.random.normal(keys[2], (N2, C2, H2, W2), dtype=jnp.float32)
    target2 = jax.random.randint(keys[3], (N2, H2, W2), 0, C2, dtype=jnp.int32)
    ce_w2 = jnp.ones((C2,), jnp.float32)
    ref3 = _reference_loss(logits2, target2, ce_w2)
    loss3 = jax.block_until_ready(
        custom_loss(logits2, target2, ce_w2, tile_pixels=128))
    np.testing.assert_allclose(np.asarray(loss3), np.asarray(ref3), rtol=1e-5, atol=1e-6)
    # Same inputs via a single lane-padded tile (TPL=256 > H*W=240).
    loss3b = jax.block_until_ready(custom_loss(logits2, target2, ce_w2))
    np.testing.assert_allclose(np.asarray(loss3b), np.asarray(ref3), rtol=1e-5, atol=1e-6)

    # Case 4: odd tile count (3 tiles) -> no pixel split, multi-tile accumulation.
    N3, C3, H3, W3 = 1, 3, 16, 24           # H*W = 384 = 3 * 128
    logits3 = jax.random.normal(keys[4], (N3, C3, H3, W3), dtype=jnp.float32)
    target3 = jax.random.randint(keys[5], (N3, H3, W3), 0, C3, dtype=jnp.int32)
    ce_w3 = 1.0 + jnp.arange(C3, dtype=jnp.float32)
    ref4 = _reference_loss(logits3, target3, ce_w3)
    loss4 = jax.block_until_ready(
        custom_loss(logits3, target3, ce_w3, tile_pixels=128))
    np.testing.assert_allclose(np.asarray(loss4), np.asarray(ref4), rtol=1e-5, atol=1e-6)

    # Case 5: bf16 logits streamed natively, upcast to f32 inside the kernel.
    logits_bf = logits.astype(jnp.bfloat16)
    loss5 = jax.block_until_ready(custom_loss(logits_bf, target, ce_weights))
    ref5 = _reference_loss(logits_bf.astype(jnp.float32), target, ce_weights)
    np.testing.assert_allclose(np.asarray(loss5), np.asarray(ref5), rtol=1e-5, atol=1e-6)

    print("KERNEL_OK")
</pallas_src>

<mosaic_0001>
module attributes {stable_mosaic.version = 11 : i64} {
  func.func @kernel(%arg0: i32, %arg1: i32, %arg2: i32, %arg3: memref<1x4x256xf32, #tpu.memory_space<vmem>>, %arg4: memref<1x1x256xi32, #tpu.memory_space<vmem>>, %arg5: memref<1x1x4x4xf32, #tpu.memory_space<vmem>>) attributes {dimension_semantics = [#tpu.dimension_semantics<parallel>, #tpu.dimension_semantics<parallel>, #tpu.dimension_semantics<arbitrary>], iteration_bounds = array<i64: 2, 1, 1>, scalar_prefetch = 0 : i64, scratch_operands = 0 : i64, tpu.core_type = #tpu.core_type<tc>, window_params = [{transform_indices = @transform_0, window_bounds = array<i64: 1, 4, 256>}, {transform_indices = @transform_1, window_bounds = array<i64: 1, 1, 256>}, {transform_indices = @transform_2, window_bounds = array<i64: 1, 1, 4, 4>}]} {
    %c0_i32 = arith.constant 0 : i32
    %0 = arith.cmpi eq, %arg2, %c0_i32 : i32
    %1 = arith.extui %0 : i1 to i32
    %c0_i32_0 = arith.constant 0 : i32
    %2 = arith.cmpi ne, %1, %c0_i32_0 : i32
    scf.if %2 {
      %cst_25 = arith.constant 0.000000e+00 : f32
      %64 = vector.broadcast %cst_25 : f32 to vector<1x1x4x4xf32>
      %c0_26 = arith.constant 0 : index
      %c0_27 = arith.constant 0 : index
      %c0_28 = arith.constant 0 : index
      %c0_29 = arith.constant 0 : index
      %65 = vector.load %arg5[%c0_26, %c0_27, %c0_28, %c0_29] : memref<1x1x4x4xf32, #tpu.memory_space<vmem>>, vector<1x1x4x4xf32>
      tpu.vector_store %arg5[%c0_26, %c0_27, %c0_28, %c0_29], %64 {strides = array<i32>} : memref<1x1x4x4xf32, #tpu.memory_space<vmem>>, vector<1x1x4x4xf32>,
    } else {
    }
    %c0 = arith.constant 0 : index
    %c0_1 = arith.constant 0 : index
    %c0_2 = arith.constant 0 : index
    %3 = vector.load %arg3[%c0, %c0_1, %c0_2] : memref<1x4x256xf32, #tpu.memory_space<vmem>>, vector<1x4x256xf32>
    %4 = vector.shape_cast %3 : vector<1x4x256xf32> to vector<4x256xf32>
    %c0_3 = arith.constant 0 : index
    %c0_4 = arith.constant 0 : index
    %c0_5 = arith.constant 0 : index
    %5 = vector.load %arg4[%c0_3, %c0_4, %c0_5] : memref<1x1x256xi32, #tpu.memory_space<vmem>>, vector<1x1x256xi32>
    %6 = vector.shape_cast %5 : vector<1x1x256xi32> to vector<1x256xi32>
    %7 = tpu.iota {dimensions = array<i32: 0>} : vector<4x256xi32>
    %8 = vector.broadcast %6 : vector<1x256xi32> to vector<4x256xi32>
    %9 = arith.cmpi eq, %7, %8 : vector<4x256xi32>
    %cst = arith.constant dense<0xFF800000> : vector<256xf32>
    %10 = vector.multi_reduction <maximumf>, %4, %cst [0] : vector<4x256xf32> to vector<256xf32>
    %11 = vector.shape_cast %10 : vector<256xf32> to vector<1x256xf32>
    %12 = vector.broadcast %11 : vector<1x256xf32> to vector<4x256xf32>
    %13 = arith.subf %4, %12 : vector<4x256xf32>
    %14 = math.exp %13 : vector<4x256xf32>
    %cst_6 = arith.constant dense<0.000000e+00> : vector<256xf32>
    %15 = vector.multi_reduction <add>, %14, %cst_6 [0] : vector<4x256xf32> to vector<256xf32>
    %16 = vector.shape_cast %15 : vector<256xf32> to vector<1x256xf32>
    %cst_7 = arith.constant 1.000000e+00 : f32
    %17 = vector.broadcast %cst_7 : f32 to vector<1x256xf32>
    %18 = arith.divf %17, %16 : vector<1x256xf32>
    %19 = vector.broadcast %18 : vector<1x256xf32> to vector<4x256xf32>
    %20 = arith.mulf %14, %19 : vector<4x256xf32>
    %21 = math.log %16 : vector<1x256xf32>
    %22 = arith.addf %11, %21 : vector<1x256xf32>
    %cst_8 = arith.constant 0.000000e+00 : f32
    %23 = vector.broadcast %cst_8 : f32 to vector<4x256xf32>
    %24 = arith.select %9, %20, %23 : vector<4x256xi1>, vector<4x256xf32>
    %cst_9 = arith.constant dense<0.000000e+00> : vector<4xf32>
    %25 = vector.multi_reduction <add>, %24, %cst_9 [1] : vector<4x256xf32> to vector<4xf32>
    %26 = vector.shape_cast %25 : vector<4xf32> to vector<4x1xf32>
    %cst_10 = arith.constant dense<0.000000e+00> : vector<4xf32>
    %27 = vector.multi_reduction <add>, %20, %cst_10 [1] : vector<4x256xf32> to vector<4xf32>
    %28 = vector.shape_cast %27 : vector<4xf32> to vector<4x1xf32>
    %cst_11 = arith.constant 1.000000e+00 : f32
    %cst_12 = arith.constant 0.000000e+00 : f32
    %29 = vector.broadcast %cst_11 : f32 to vector<4x256xf32>
    %30 = vector.broadcast %cst_12 : f32 to vector<4x256xf32>
    %31 = arith.select %9, %29, %30 : vector<4x256xi1>, vector<4x256xf32>
    %cst_13 = arith.constant dense<0.000000e+00> : vector<4xf32>
    %32 = vector.multi_reduction <add>, %31, %cst_13 [1] : vector<4x256xf32> to vector<4xf32>
    %33 = vector.shape_cast %32 : vector<4xf32> to vector<4x1xf32>
    %34 = vector.broadcast %22 : vector<1x256xf32> to vector<4x256xf32>
    %35 = arith.subf %34, %4 : vector<4x256xf32>
    %cst_14 = arith.constant 0.000000e+00 : f32
    %36 = vector.broadcast %cst_14 : f32 to vector<4x256xf32>
    %37 = arith.select %9, %35, %36 : vector<4x256xi1>, vector<4x256xf32>
    %cst_15 = arith.constant dense<0.000000e+00> : vector<4xf32>
    %38 = vector.multi_reduction <add>, %37, %cst_15 [1] : vector<4x256xf32> to vector<4xf32>
    %39 = vector.shape_cast %38 : vector<4xf32> to vector<4x1xf32>
    %40 = tpu.iota {dimensions = array<i32: 1>} : vector<4x4xi32>
    %c0_i32_16 = arith.constant 0 : i32
    %41 = vector.broadcast %c0_i32_16 : i32 to vector<4x4xi32>
    %42 = arith.cmpi eq, %40, %41 : vector<4x4xi32>
    %c1_i32 = arith.constant 1 : i32
    %43 = vector.broadcast %c1_i32 : i32 to vector<4x4xi32>
    %44 = arith.cmpi eq, %40, %43 : vector<4x4xi32>
    %c2_i32 = arith.constant 2 : i32
    %45 = vector.broadcast %c2_i32 : i32 to vector<4x4xi32>
    %46 = arith.cmpi eq, %40, %45 : vector<4x4xi32>
    %47 = vector.shape_cast %33 : vector<4x1xf32> to vector<4x1xf32>
    %48 = vector.broadcast %47 : vector<4x1xf32> to vector<4x4xf32>
    %49 = vector.shape_cast %39 : vector<4x1xf32> to vector<4x1xf32>
    %50 = vector.broadcast %49 : vector<4x1xf32> to vector<4x4xf32>
    %51 = arith.select %46, %48, %50 : vector<4x4xi1>, vector<4x4xf32>
    %52 = vector.shape_cast %28 : vector<4x1xf32> to vector<4x1xf32>
    %53 = vector.broadcast %52 : vector<4x1xf32> to vector<4x4xf32>
    %54 = arith.select %44, %53, %51 : vector<4x4xi1>, vector<4x4xf32>
    %55 = vector.shape_cast %26 : vector<4x1xf32> to vector<4x1xf32>
    %56 = vector.broadcast %55 : vector<4x1xf32> to vector<4x4xf32>
    %57 = arith.select %42, %56, %54 : vector<4x4xi1>, vector<4x4xf32>
    %c0_17 = arith.constant 0 : index
    %c0_18 = arith.constant 0 : index
    %c0_19 = arith.constant 0 : index
    %c0_20 = arith.constant 0 : index
    %58 = vector.load %arg5[%c0_17, %c0_18, %c0_19, %c0_20] : memref<1x1x4x4xf32, #tpu.memory_space<vmem>>, vector<1x1x4x4xf32>
    %59 = vector.shape_cast %58 : vector<1x1x4x4xf32> to vector<4x4xf32>
    %60 = arith.addf %59, %57 : vector<4x4xf32>
    %c0_21 = arith.constant 0 : index
    %c0_22 = arith.constant 0 : index
    %c0_23 = arith.constant 0 : index
    %c0_24 = arith.constant 0 : index
    %61 = vector.load %arg5[%c0_21, %c0_22, %c0_23, %c0_24] : memref<1x1x4x4xf32, #tpu.memory_space<vmem>>, vector<1x1x4x4xf32>
    %62 = vector.shape_cast %61 : vector<1x1x4x4xf32> to vector<4x4xf32>
    %63 = vector.shape_cast %60 : vector<4x4xf32> to vector<1x1x4x4xf32>
    tpu.vector_store %arg5[%c0_21, %c0_22, %c0_23, %c0_24], %63 {strides = array<i32>} : memref<1x1x4x4xf32, #tpu.memory_space<vmem>>, vector<1x1x4x4xf32>,
    return
  }
  func.func @transform_0(%arg0: i32, %arg1: i32, %arg2: i32) -> (i32, i32, i32) {
    %c1_i32 = arith.constant 1 : i32
    %0 = arith.muli %arg1, %c1_i32 : i32
    %1 = arith.addi %0, %arg2 : i32
    %c0_i32 = arith.constant 0 : i32
    %c0_i32_0 = arith.constant 0 : i32
    return %arg0, %c0_i32, %1 : i32, i32, i32
  }
  func.func @transform_1(%arg0: i32, %arg1: i32, %arg2: i32) -> (i32, i32, i32) {
    %c1_i32 = arith.constant 1 : i32
    %0 = arith.muli %arg1, %c1_i32 : i32
    %1 = arith.addi %0, %arg2 : i32
    %c0_i32 = arith.constant 0 : i32
    %c0_i32_0 = arith.constant 0 : i32
    return %arg0, %c0_i32, %1 : i32, i32, i32
  }
  func.func @transform_2(%arg0: i32, %arg1: i32, %arg2: i32) -> (i32, i32, i32, i32) {
    %c0_i32 = arith.constant 0 : i32
    %c0_i32_0 = arith.constant 0 : i32
    %c0_i32_1 = arith.constant 0 : i32
    return %arg0, %arg1, %c0_i32, %c0_i32_0 : i32, i32, i32, i32
  }
}

</mosaic_0001>

<llo_original>
// kernel: custom_loss.1
$region0: #{custom_loss.1}
  #allocation0 [shape = 'u32[]', space=smem, size = 0x4, offset = 0x4, fixed_abs, tag = 'smem constant byte address 0x4 - core index']
  #allocation1 [shape = 'u32[144,128]{1,0:T(1,128)}', space=vmem, size = 0x12000, scoped, tag = 'internal scratch']
  %s0 = inlined_call_operand.vmem [shape: f32[2,4,256], index: 0, kind: input, shape index: {}]
  %s1 = inlined_call_operand.vmem [shape: s32[2,1,256], index: 1, kind: input, shape index: {}]
  %s2 = inlined_call_operand.vmem [shape: f32[2,1,4,4], index: 2, kind: output, shape index: {}]
  %s3 = sld [smem:[#allocation0]]
  $region45: #{custom_loss.1} parent=0
    _
  %s5 = ssub.s32 1, %s3
  %s6 = scalar_select 0, %s5, %s3
  loop: start=0, step=1, limit=4
  $region2: #{custom_loss.1} parent=0 // loop_pre_header
    _
  $region3: #{custom_loss.1} parent=0 // loop_header
    %s8 = sphi 0, %s12
    %p9 = scmp.ge.s32.totalorder %s8, 4
    %s15 = sphi 0, %s34
    %s16 = sphi 0, %s30
    %s17 = sphi 0, %s26
    %s18 = sphi 0, %s15
    %s19 = sphi 0, %s16
    %s20 = sphi 0, %s17
    %s21 = sphi 0, %s18
    %s22 = sphi 0, %s19
    %s23 = sphi 0, %s20
    %s41 = sphi 0, %s43
    %s44 = sphi 0, %s41
    %s45 = sphi 0, %s44
    %s61 = sphi 0, %s45
    %s71 = sphi 0, %s73
    %s74 = sphi 0, %s71
    %s75 = sphi 0, %s74
    %s91 = sphi 0, %s75
    %s99 = sphi 0, %s101
    %s102 = sphi 0, %s99
    %s103 = sphi 0, %s102
    %s119 = sphi 0, %s103
  $region4: #{custom_loss.1} parent=0 // loop_header_branch
    %11 = sbr.rel (%p9) target = $region8
  $region5: #{custom_loss.1} parent=0 // loop_body
    %s13 = ssub.s32 %s8, 1
    %s14 = ssub.s32 %s8, 2
    %s24 = sadd.s32 1, %s17
    %p25 = scmp.ge.s32.totalorder %s24, 1
    %s26 = scalar_select %p25, 0, %s24
    %s27 = sadd.s32 1, %s16
    %s28 = scalar_select %p25, %s27, %s16
    %p29 = scmp.ge.s32.totalorder %s28, 1
    %s30 = scalar_select %p29, 0, %s28
    %s31 = sadd.s32 1, %s15
    %s32 = scalar_select %p29, %s31, %s15
    %p33 = scmp.ge.s32.totalorder %s32, 2
    %s34 = scalar_select %p33, 0, %s32
    %s35 = sadd.s32 %s16, %s17
    %s36 = sadd.s32 %s30, %s26
    %s37 = ssub.s32 %s15, %s34
    %s38 = ssub.s32 %s35, %s36
    %s39 = sor.u32 %s37, %s38
    %p40 = scmp.eq.s32.totalorder %s39, 0
    %s42 = sadd.s32 %s41, 1
    %s43 = scalar_select %p40, %s41, %s42
    %p46 = pneg %p40
    %p47 = scmp.eq.s32.totalorder %s8, 1
    %p48 = por %p46, %p47
    %p49 = scmp.ne.s32.totalorder %s41, %s44
    %p50 = scmp.eq.s32.totalorder %s8, 0
    %p51 = por %p49, %p50
    %p52 = scmp.ne.s32.totalorder %s41, %s44
    %p53 = scmp.eq.s32.totalorder %s13, 1
    %p54 = por %p52, %p53
    %p55 = scmp.ne.s32.totalorder %s44, %s45
    %p56 = scmp.eq.s32.totalorder %s13, 0
    %p57 = por %p55, %p56
    %p58 = scmp.ne.s32.totalorder %s44, %s45
    %p59 = scmp.eq.s32.totalorder %s14, 1
    %p60 = por %p58, %p59
    %p62 = scmp.ne.s32.totalorder %s45, %s61
    %p63 = scmp.eq.s32.totalorder %s14, 0
    %p64 = por %p62, %p63
    %s65 = sadd.s32 %s16, %s17
    %s66 = sadd.s32 %s30, %s26
    %s67 = ssub.s32 %s15, %s34
    %s68 = ssub.s32 %s65, %s66
    %s69 = sor.u32 %s67, %s68
    %p70 = scmp.eq.s32.totalorder %s69, 0
    %s72 = sadd.s32 %s71, 1
    %s73 = scalar_select %p70, %s71, %s72
    %p76 = pneg %p70
    %p77 = scmp.eq.s32.totalorder %s8, 1
    %p78 = por %p76, %p77
    %p79 = scmp.ne.s32.totalorder %s71, %s74
    %p80 = scmp.eq.s32.totalorder %s8, 0
    %p81 = por %p79, %p80
    %p82 = scmp.ne.s32.totalorder %s71, %s74
    %p83 = scmp.eq.s32.totalorder %s13, 1
    %p84 = por %p82, %p83
    %p85 = scmp.ne.s32.totalorder %s74, %s75
    %p86 = scmp.eq.s32.totalorder %s13, 0
    %p87 = por %p85, %p86
    %p88 = scmp.ne.s32.totalorder %s74, %s75
    %p89 = scmp.eq.s32.totalorder %s14, 1
    %p90 = por %p88, %p89
    %p92 = scmp.ne.s32.totalorder %s75, %s91
    %p93 = scmp.eq.s32.totalorder %s14, 0
    %p94 = por %p92, %p93
    %s95 = ssub.s32 %s15, %s34
    %s96 = ssub.s32 %s16, %s30
    %s97 = sor.u32 %s95, %s96
    %p98 = scmp.eq.s32.totalorder %s97, 0
    %s100 = sadd.s32 %s99, 1
    %s101 = scalar_select %p98, %s99, %s100
    %p104 = pneg %p98
    %p105 = scmp.eq.s32.totalorder %s8, 1
    %p106 = por %p104, %p105
    %p107 = scmp.ne.s32.totalorder %s99, %s102
    %p108 = scmp.eq.s32.totalorder %s8, 0
    %p109 = por %p107, %p108
    %p110 = scmp.ne.s32.totalorder %s99, %s102
    %p111 = scmp.eq.s32.totalorder %s13, 1
    %p112 = por %p110, %p111
    %p113 = scmp.ne.s32.totalorder %s102, %s103
    %p114 = scmp.eq.s32.totalorder %s13, 0
    %p115 = por %p113, %p114
    %p116 = scmp.ne.s32.totalorder %s102, %s103
    %p117 = scmp.eq.s32.totalorder %s14, 1
    %p118 = por %p116, %p117
    %p120 = scmp.ne.s32.totalorder %s103, %s119
    %p121 = scmp.eq.s32.totalorder %s14, 0
    %p122 = por %p120, %p121
    %p123 = scmp.le.s32.totalorder 1, %s8
    %p124 = scmp.lt.s32.totalorder %s8, 3
    %p125 = pnand %p123, %p124
    %p126 = pneg %p125
    // Predicated region
    $region9: #{custom_loss.1} parent=5 // pred_check
      _
    $region10: #{custom_loss.1} parent=5 // pred_check_branch
      %128 = sbr.rel (%p125) target = $region12
    $region11: #{custom_loss.1} parent=5 // pred_region
      %s129 = ssub.s32 %s8, 1
    $region12: #{custom_loss.1} parent=5 // pred_fallthru
      _
    %p130 = scmp.lt.s32.totalorder %s8, 2
    // Predicated region
    $region13: #{custom_loss.1} parent=5 // pred_check
      %p131 = pneg %p130
    $region14: #{custom_loss.1} parent=5 // pred_check_branch
      %133 = sbr.rel (%p131) target = $region16
    $region15: #{custom_loss.1} parent=5 // pred_region
      // Predicated region
      $region17: #{custom_loss.1} parent=15 // pred_check
        %p134 = pneg %p51
      $region18: #{custom_loss.1} parent=15 // pred_check_branch
        %136 = sbr.rel (%p134) target = $region20
      $region19: #{custom_loss.1} parent=15 // pred_region
        %s137 = sadd.s32 %s16, %s17
        %s138 = smul.u32 2, %s137
        %p139 = scmp.lt.s32.totalorder %s15, 1
        %s140 = scalar_select %p139, %s15, 1
        %p141 = scmp.lt.s32.totalorder %s138, 1
        %s142 = scalar_select %p141, %s138, 1
        %s143 = smul.addr %s140, 2
        %s144 = sadd.s32 %s142, %s143
        %s145 = smul.addr %s144, 4
        %s146 = scalar_lea.vmem %s0, %s145
        %s147 = sadd.s32 %s16, %s17
        %s148 = smul.u32 2, %s147
      $region20: #{custom_loss.1} parent=15 // pred_fallthru
        _
      // Predicated region
      $region21: #{custom_loss.1} parent=15 // pred_check
        %p149 = pneg %p81
      $region22: #{custom_loss.1} parent=15 // pred_check_branch
        %151 = sbr.rel (%p149) target = $region24
      $region23: #{custom_loss.1} parent=15 // pred_region
        %s152 = sadd.s32 %s16, %s17
        %s153 = smul.u32 2, %s152
        %p154 = scmp.lt.s32.totalorder %s15, 1
        %s155 = scalar_select %p154, %s15, 1
        %p156 = scmp.lt.s32.totalorder %s153, 1
        %s157 = scalar_select %p156, %s153, 1
        %s158 = smul.addr %s155, 2
        %s159 = sadd.s32 %s157, %s158
        %s160 = scalar_lea.vmem %s1, %s159
        %s161 = sadd.s32 %s16, %s17
        %s162 = smul.u32 2, %s161
      $region24: #{custom_loss.1} parent=15 // pred_fallthru
        _
    $region16: #{custom_loss.1} parent=5 // pred_fallthru
      _
    %p163 = scmp.le.s32.totalorder 1, %s8
    %p164 = scmp.lt.s32.totalorder %s8, 3
    %p165 = pnand %p163, %p164
    %p166 = pneg %p165
    // Predicated region
    $region25: #{custom_loss.1} parent=5 // pred_check
      _
    $region26: #{custom_loss.1} parent=5 // pred_check_branch
      %168 = sbr.rel (%p165) target = $region28
    $region27: #{custom_loss.1} parent=5 // pred_region
      %s169 = ssub.s32 %s8, 1
      %s170 = sadd.s32 %s19, %s20
      %s171 = smul.u32 2, %s170
      %p172 = scmp.lt.s32.totalorder %s18, 1
      %s173 = scalar_select %p172, %s18, 1
      %p174 = scmp.lt.s32.totalorder %s171, 1
      %s175 = scalar_select %p174, %s171, 1
      %s176 = smul.addr %s173, 2
      %s177 = sadd.s32 %s175, %s176
      %s178 = smul.addr %s177, 4
      %s179 = scalar_lea.vmem %s0, %s178
      %p180 = pneg %p57
      %p181 = pneg %p54
      %s182 = sadd.s32 %s19, %s20
      %s183 = smul.u32 2, %s182
      %p184 = scmp.lt.s32.totalorder %s18, 1
      %s185 = scalar_select %p184, %s18, 1
      %p186 = scmp.lt.s32.totalorder %s183, 1
      %s187 = scalar_select %p186, %s183, 1
      %s188 = smul.addr %s185, 2
      %s189 = sadd.s32 %s187, %s188
      %s190 = scalar_lea.vmem %s1, %s189
      %p191 = pneg %p87
      %p192 = pneg %p84
      %p193 = pneg %p115
      %p194 = pneg %p112
      %p195 = scmp.lt.s32.totalorder %s18, 1
      %s196 = scalar_select %p195, %s18, 1
      %p197 = scmp.lt.s32.totalorder %s19, 0
      %s198 = scalar_select %p197, %s19, 0
      %s199 = sadd.s32 %s198, %s196
      %s200 = smul.addr %s199, 4
      %s201 = scalar_lea.vmem %s2, %s200
      %s202 = sadd.s32 %s19, %s20
      %s203 = smul.u32 2, %s202
      %p204 = scmp.lt.s32.totalorder %s18, 1
      %s205 = scalar_select %p204, %s18, 1
      %p206 = scmp.lt.s32.totalorder %s203, 1
      %s207 = scalar_select %p206, %s203, 1
      %s208 = smul.addr %s205, 2
      %s209 = sadd.s32 %s207, %s208
      %s210 = smul.addr %s209, 4
      %s211 = scalar_lea.vmem %s0, %s210
      %s212 = sadd.s32 %s19, %s20
      %s213 = smul.u32 2, %s212
      %s214 = sadd.s32 %s19, %s20
      %s215 = smul.u32 2, %s214
      %p216 = scmp.lt.s32.totalorder %s18, 1
      %s217 = scalar_select %p216, %s18, 1
      %p218 = scmp.lt.s32.totalorder %s215, 1
      %s219 = scalar_select %p218, %s215, 1
      %s220 = smul.addr %s217, 2
      %s221 = sadd.s32 %s219, %s220
      %s222 = scalar_lea.vmem %s1, %s221
      %s223 = sadd.s32 %s19, %s20
      %s224 = smul.u32 2, %s223
      %p225 = scmp.lt.s32.totalorder %s18, 1
      %s226 = scalar_select %p225, %s18, 1
      %p227 = scmp.lt.s32.totalorder %s19, 0
      %s228 = scalar_select %p227, %s19, 0
      %s229 = sadd.s32 %s228, %s226
      %s230 = smul.addr %s229, 4
      %s231 = scalar_lea.vmem %s2, %s230
      %p232 = scmp.eq.s32.totalorder %s20, 0
      // Predicated region
      $region29: #{custom_loss.1} parent=27 // pred_check
        %p233 = pneg %p232
      $region30: #{custom_loss.1} parent=27 // pred_check_branch
        %235 = sbr.rel (%p233) target = $region32
      $region31: #{custom_loss.1} parent=27 // pred_region
        %vm236 = vcmask 27648
        %237 = vst.msk [vmem:[%s231] sm:$0xf] %vm236, 0.0
      $region32: #{custom_loss.1} parent=27 // pred_fallthru
        _
      %v238 = vld [vmem:[%s211] sm:$0xff]
      %v239 = vld [vmem:[%s222] sm:$0x3]
      %v240 = vlaneseq
      %v241 = vshrl.u32 %v240, 7
      %v242 = vlaneseq
      %v243 = vshrl.u32 %v242, 7
      %v244 = vsub.s32 0, %v243
      %v245 = vrot.slane %v239, %v244
      %v246 = vlaneseq
      %v247 = vshrl.u32 %v246, 7
      %v248 = vsub.s32 1, %v247
      %v249 = vrot.slane %v239, %v248
      %vm250 = vcmp.eq.s32.totalorder %v241, %v245
      %vm251 = vcmp.eq.s32.totalorder %v241, %v249
      %v253 = vcombine.high %v238, %v238
      %vm255 = vcmask 1043456
      %v256 = vsel %vm255, %v238, -inf
      %v257 = vrot.slane %v256, 4
      %v258 = vmax.f32 %v256, %v257
      %v259 = vrot.slane %v258, 2
      %v260 = vmax.f32 %v258, %v259
      %v261 = vrot.slane %v260, 1
      %v262 = vmax.f32 %v260, %v261
      %v263 = vsel %vm255, %v253, -inf
      %v264 = vrot.slane %v263, 4
      %v265 = vmax.f32 %v263, %v264
      %v266 = vrot.slane %v265, 2
      %v267 = vmax.f32 %v265, %v266
      %v268 = vrot.slane %v267, 1
      %v269 = vmax.f32 %v267, %v268
      %v272 = vcombine.low %v262, %v269
      %v274 = vsub.f32 %v238, %v272
      %v275 = vmul.f32 %v274, 1.442695
      %v276 = vpow.pop %v275
      %v278 = vcombine.high %v276, %v276
      %v280 = vsel %vm255, %v276, 0.0
      %v281 = vrot.slane %v280, 4
      %v282 = vadd.f32 %v280, %v281
      %v283 = vrot.slane %v282, 2
      %v284 = vadd.f32 %v282, %v283
      %v285 = vrot.slane %v284, 1
      %v286 = vadd.f32 %v284, %v285
      %v287 = vsel %vm255, %v278, 0.0
      %v288 = vrot.slane %v287, 4
      %v289 = vadd.f32 %v287, %v288
      %v290 = vrot.slane %v289, 2
      %v291 = vadd.f32 %v289, %v290
      %v292 = vrot.slane %v291, 1
      %v293 = vadd.f32 %v291, %v292
      %v294 = vrcp.pop %v286
      %v295 = vmul.f32 1.0, %v294
      %v296 = vrcp.pop %v293
      %v297 = vmul.f32 1.0, %v296
      %v300 = vcombine.low %v295, %v297
      %v302 = vmul.f32 %v276, %v300
      %v303 = vlog2.pop %v286
      %v304 = vmul.f32 %v303, 0.6931472
      %v305 = vlog2.pop %v293
      %v306 = vmul.f32 %v305, 0.6931472
      %v307 = vadd.f32 %v262, %v304
      %v308 = vadd.f32 %v269, %v306
      %v310 = vcombine.high %v302, %v302
      %v312 = vsel %vm250, %v302, 0.0
      %v313 = vsel %vm251, %v310, 0.0
      %v314 = vsel %vm255, %v312, 0.0
      %v315 = vsel %vm255, %v313, 0.0
      %v316 = vadd.f32 %v314, %v315
      %317 = vadd.xlane.f32.xlu0 %v316
      %v318 = vpop.xlane.xlu0 %317
      %v319 = vsel %vm255, %v302, 0.0
      %v320 = vsel %vm255, %v310, 0.0
      %v321 = vadd.f32 %v319, %v320
      %322 = vadd.xlane.f32.xlu0 %v321
      %v323 = vpop.xlane.xlu0 %322
      %v324 = vsel %vm250, 1.0, 0.0
      %v325 = vsel %vm251, 1.0, 0.0
      %v326 = vsel %vm255, %v324, 0.0
      %v327 = vsel %vm255, %v325, 0.0
      %v328 = vadd.f32 %v326, %v327
      %329 = vadd.xlane.f32.xlu0 %v328
      %v330 = vpop.xlane.xlu0 %329
      %v331 = vsub.f32 %v307, %v238
      %v332 = vsub.f32 %v308, %v253
      %v333 = vsel %vm250, %v331, 0.0
      %v334 = vsel %vm251, %v332, 0.0
      %v335 = vsel %vm255, %v333, 0.0
      %v336 = vsel %vm255, %v334, 0.0
      %v337 = vadd.f32 %v335, %v336
      %338 = vadd.xlane.f32.xlu0 %v337
      %v339 = vpop.xlane.xlu0 %338
      %v340 = vlaneseq
      %v341 = vand.u32 %v340, 127
      %vm342 = vcmp.eq.s32.totalorder %v341, 0
      %vm343 = vcmp.eq.s32.totalorder %v341, 1
      %vm344 = vcmp.eq.s32.totalorder %v341, 2
      %v345 = vsel %vm344, %v330, %v339
      %v346 = vsel %vm343, %v323, %v345
      %v347 = vsel %vm342, %v318, %v346
      %v348 = vld [vmem:[%s231] sm:$0xf]
      %v349 = vadd.f32 %v348, %v347
      %vm350 = vcmask 27648
      %351 = vst.msk [vmem:[%s231] sm:$0xf] %vm350, %v349
      %p352 = scmp.lt.s32.totalorder %s18, 1
      %s353 = scalar_select %p352, %s18, 1
      %p354 = scmp.lt.s32.totalorder %s19, 0
      %s355 = scalar_select %p354, %s19, 0
      %s356 = sadd.s32 %s355, %s353
      %s357 = smul.addr %s356, 4
      %s358 = scalar_lea.vmem %s2, %s357
      // Predicated region
      $region33: #{custom_loss.1} parent=27 // pred_check
        %p359 = pneg %p112
      $region34: #{custom_loss.1} parent=27 // pred_check_branch
        %361 = sbr.rel (%p359) target = $region36
      $region35: #{custom_loss.1} parent=27 // pred_region
        _
      $region36: #{custom_loss.1} parent=27 // pred_fallthru
        _
    $region28: #{custom_loss.1} parent=5 // pred_fallthru
      _
    %p362 = scmp.le.s32.totalorder 2, %s8
    // Predicated region
    $region37: #{custom_loss.1} parent=5 // pred_check
      %p363 = pneg %p362
    $region38: #{custom_loss.1} parent=5 // pred_check_branch
      %365 = sbr.rel (%p363) target = $region40
    $region39: #{custom_loss.1} parent=5 // pred_region
      %s366 = ssub.s32 %s8, 2
      // Predicated region
      $region41: #{custom_loss.1} parent=39 // pred_check
        %p367 = pneg %p118
      $region42: #{custom_loss.1} parent=39 // pred_check_branch
        %369 = sbr.rel (%p367) target = $region44
      $region43: #{custom_loss.1} parent=39 // pred_region
        %p370 = scmp.lt.s32.totalorder %s21, 1
        %s371 = scalar_select %p370, %s21, 1
        %p372 = scmp.lt.s32.totalorder %s22, 0
        %s373 = scalar_select %p372, %s22, 0
        %s374 = sadd.s32 %s373, %s371
        %s375 = smul.addr %s374, 4
        %s376 = scalar_lea.vmem %s2, %s375
      $region44: #{custom_loss.1} parent=39 // pred_fallthru
        _
    $region40: #{custom_loss.1} parent=5 // pred_fallthru
      _
  $region6: #{custom_loss.1} parent=0 // loop_footer
    %s12 = sadd.s32 1, %s8
  $region7: #{custom_loss.1} parent=0 // loop_footer_branch
    %7 = sbr.rel target = $region3
  $region8: #{custom_loss.1} parent=0 // loop_exit
    _

</llo_original>
